<compile_context>
chip_gen: v5e
topology: v5e:2x2
jax: 0.10.0
libtpu: 0.0.40
codegen_flags: <defaults>
</compile_context>

<pallas_src>
import functools

import jax
import jax.numpy as jnp
from jax.experimental import pallas as pl
from jax.experimental.pallas import tpu as pltpu


def _round_up(x, m):
    return (x + m - 1) // m * m


def _round_down(x, m):
    return max(m, x // m * m)


def _vmem_plan():
    """Return (working_bytes, vmem_limit_bytes) for the current TPU generation."""
    try:
        cap = getattr(pltpu.get_tpu_info(), "vmem_capacity_bytes", None)
    except Exception:
        cap = None
    if cap is None:
        cap = 64 * 1024 * 1024                        # conservative (v7x-sized)
    if cap >= 128 * 1024 * 1024:                      # v5e / v6e: 128 MiB
        return 64 * 1024 * 1024, 100 * 1024 * 1024
    return 28 * 1024 * 1024, 48 * 1024 * 1024         # v7x: 64 MiB per TC


def _choose_tiles(nc, hw, itemsize, working_bytes):
    """Pick (row_tile TR, lane_tile TL), multiples of the native (sub, 128) tile."""
    sub = max(8, 32 // itemsize)    # dtype-native sublane tile: f32->8, bf16->16, i8->32
    lane = 128
    # Bytes per (row, column) of one block: 2 inputs x 2 pipeline buffers in the
    # native dtype plus ~4 block-sized f32 temporaries (upcast / centered / squared).
    per_elem = 4 * itemsize + 16
    # Lane-padded (TR, 1) buffers: 6 f32 scratch accumulators + 2 output buffers.
    per_row_fixed = 8 * lane * 4

    tl_full = _round_up(hw, lane)
    tr_full = _round_up(nc, sub)
    # v7x dual-TensorCore: keep >= 2 row tiles whenever there are enough rows so
    # the "parallel" row axis can be sharded across both cores.
    tr_cap = _round_up(pl.cdiv(nc, 2), sub) if nc >= 2 * sub else tr_full

    # Give the lane (reduction) axis as much as fits with one sublane tile of rows ...
    tl = min(tl_full,
             _round_down((working_bytes // sub - per_row_fixed) // per_elem, lane))
    # ... fill the rows from the leftover budget ...
    tr = _round_down(working_bytes // (tl * per_elem + per_row_fixed), sub)
    tr = max(min(tr, tr_full, tr_cap), sub)
    # ... and re-grow the lane tile if the row caps left budget unused.
    tl = max(min(tl_full, _round_down(working_bytes // tr // per_elem, lane)), lane)
    return tr, tl


def _spatial_std_kernel(j_ref, d_ref, out_ref,
                        mu_j_ref, mu_d_ref, sj_ref, sjj_ref, sd_ref, sdd_ref,
                        *, hw, tl, nk, mask_tail):
    """Grid: (row tiles [parallel], HW chunks [arbitrary, reduction axis last])."""
    k = pl.program_id(1)
    tail_cols = hw - (nk - 1) * tl        # valid columns of the last HW chunk (static)

    def loaded(masked):
        j = j_ref[...].astype(jnp.float32)
        d = d_ref[...].astype(jnp.float32)
        if masked:
            col = jax.lax.broadcasted_iota(jnp.int32, j.shape, 1)
            return j, d, col < tail_cols
        return j, d, None

    @pl.when(k == 0)
    def _init():
        # Per-row shift (mean of the first chunk) -> removes the catastrophic
        # cancellation of the single-pass sumsq - sum^2/n variance in f32.
        j, d, valid = loaded(mask_tail and nk == 1)
        if valid is not None:
            j = jnp.where(valid, j, 0.0)
            d = jnp.where(valid, d, 0.0)
        inv_n0 = 1.0 / min(tl, hw)
        mu_j_ref[...] = jnp.sum(j, axis=-1, keepdims=True) * inv_n0
        mu_d_ref[...] = jnp.sum(d, axis=-1, keepdims=True) * inv_n0
        sj_ref[...] = jnp.zeros_like(sj_ref)
        sjj_ref[...] = jnp.zeros_like(sjj_ref)
        sd_ref[...] = jnp.zeros_like(sd_ref)
        sdd_ref[...] = jnp.zeros_like(sdd_ref)

    def accumulate(masked):
        j, d, valid = loaded(masked)
        jc = j - mu_j_ref[...]
        dc = d - mu_d_ref[...]
        if valid is not None:
            jc = jnp.where(valid, jc, 0.0)
            dc = jnp.where(valid, dc, 0.0)
        sj_ref[...] += jnp.sum(jc, axis=-1, keepdims=True)
        sjj_ref[...] += jnp.sum(jc * jc, axis=-1, keepdims=True)
        sd_ref[...] += jnp.sum(dc, axis=-1, keepdims=True)
        sdd_ref[...] += jnp.sum(dc * dc, axis=-1, keepdims=True)

    if mask_tail and nk > 1:
        # Lane-mask work only on the ragged tail chunk; all other chunks stay clean.
        @pl.when(k < nk - 1)
        def _body():
            accumulate(False)

        @pl.when(k == nk - 1)
        def _tail():
            accumulate(True)
    else:
        accumulate(mask_tail)

    @pl.when(k == nk - 1)
    def _finalize():
        inv_n = 1.0 / hw
        # hw == 1 -> NaN, matching torch's unbiased std of a single element.
        inv_nm1 = (1.0 / (hw - 1)) if hw > 1 else float("nan")

        def _std(s_ref, ss_ref):
            s = s_ref[...]
            var = (ss_ref[...] - s * s * inv_n) * inv_nm1
            return jnp.sqrt(jnp.maximum(var, 0.0))

        diff = _std(sj_ref, sjj_ref) - _std(sd_ref, sdd_ref)
        out_ref[...] = diff * diff        # (TR, 1) per-row squared std difference


def rgb_spatial_variation_loss(J, direct):
    """J, direct: NCHW arrays of identical shape. Returns scalar MSE of spatial stds."""
    assert J.shape == direct.shape
    N, C, H, W = J.shape
    NC, HW = N * C, H * W

    # Row-major NCHW -> [NC, HW] is a free view (no HBM copy).
    j2 = J.reshape(NC, HW)
    d2 = direct.reshape(NC, HW)

    itemsize = jnp.dtype(J.dtype).itemsize
    working_bytes, vmem_limit = _vmem_plan()
    TR, TL = _choose_tiles(NC, HW, itemsize, working_bytes)
    gi = pl.cdiv(NC, TR)
    gk = pl.cdiv(HW, TL)

    kernel = functools.partial(
        _spatial_std_kernel, hw=HW, tl=TL, nk=gk, mask_tail=(HW % TL != 0))

    partials = pl.pallas_call(
        kernel,
        out_shape=jax.ShapeDtypeStruct((gi * TR, 1), jnp.float32),
        grid_spec=pltpu.PrefetchScalarGridSpec(
            num_scalar_prefetch=0,
            grid=(gi, gk),
            in_specs=[
                pl.BlockSpec((TR, TL), lambda i, k: (i, k)),
                pl.BlockSpec((TR, TL), lambda i, k: (i, k)),
            ],
            out_specs=pl.BlockSpec((TR, 1), lambda i, k: (i, 0)),
            # mu_j, mu_d, sum_j, sumsq_j, sum_d, sumsq_d
            scratch_shapes=[pltpu.VMEM((TR, 1), jnp.float32) for _ in range(6)],
        ),
        compiler_params=pltpu.CompilerParams(
            dimension_semantics=("parallel", "arbitrary"),
            vmem_limit_bytes=vmem_limit,
        ),
        cost_estimate=pl.CostEstimate(
            flops=8 * NC * HW,
            transcendentals=2 * NC,
            bytes_accessed=2 * NC * HW * itemsize + gi * TR * 4,
        ),
    )(j2, d2)

    # Rows >= NC of the last row tile hold garbage; drop them before reducing.
    loss = jnp.sum(partials[:NC, 0]) / NC
    # TODO(synk): the torch module's host-side "NaN spatial variation loss!" print
    # (data-dependent debug side effect) is not reproduced.
    return loss.astype(J.dtype)


def _reference(J, direct):
    std_j = jnp.std(J.astype(jnp.float32), axis=(2, 3), ddof=1)
    std_d = jnp.std(direct.astype(jnp.float32), axis=(2, 3), ddof=1)
    return jnp.mean((std_j - std_d) ** 2).astype(J.dtype)


if __name__ == "__main__":
    key = jax.random.PRNGKey(0)
    k1, k2 = jax.random.split(key)

    # Primary small NCHW case.
    N, C, H, W = 2, 4, 16, 16
    J = jax.random.normal(k1, (N, C, H, W), dtype=jnp.float32)
    direct = jax.random.normal(k2, (N, C, H, W), dtype=jnp.float32) * 0.5 + 0.1

    out = jax.block_until_ready(rgb_spatial_variation_loss(J, direct))
    ref = jax.block_until_ready(_reference(J, direct))
    assert jnp.allclose(out, ref, rtol=1e-4, atol=1e-6), (out, ref)

    # Ragged case: exercises the tail-row and tail-lane masking paths (no pad).
    k3, k4 = jax.random.split(k2)
    J2 = jax.random.normal(k3, (1, 3, 10, 13), dtype=jnp.float32) * 2.0 + 0.3
    D2 = jax.random.normal(k4, (1, 3, 10, 13), dtype=jnp.float32)
    out2 = jax.block_until_ready(rgb_spatial_variation_loss(J2, D2))
    ref2 = jax.block_until_ready(_reference(J2, D2))
    assert jnp.allclose(out2, ref2, rtol=1e-4, atol=1e-6), (out2, ref2)

    print("KERNEL_OK")
</pallas_src>

<mosaic_0001>
module attributes {stable_mosaic.version = 11 : i64} {
  func.func @_spatial_std_kernel(%arg0: i32, %arg1: i32, %arg2: memref<8x256xf32, #tpu.memory_space<vmem>>, %arg3: memref<8x256xf32, #tpu.memory_space<vmem>>, %arg4: memref<8x1xf32, #tpu.memory_space<vmem>>, %arg5: memref<8x1xf32, #tpu.memory_space<vmem>>, %arg6: memref<8x1xf32, #tpu.memory_space<vmem>>, %arg7: memref<8x1xf32, #tpu.memory_space<vmem>>, %arg8: memref<8x1xf32, #tpu.memory_space<vmem>>, %arg9: memref<8x1xf32, #tpu.memory_space<vmem>>, %arg10: memref<8x1xf32, #tpu.memory_space<vmem>>) attributes {dimension_semantics = [#tpu.dimension_semantics<parallel>, #tpu.dimension_semantics<arbitrary>], iteration_bounds = array<i64: 1, 1>, scalar_prefetch = 0 : i64, scratch_operands = 6 : i64, tpu.core_type = #tpu.core_type<tc>, window_params = [{transform_indices = @transform_0, window_bounds = array<i64: 8, 256>}, {transform_indices = @transform_1, window_bounds = array<i64: 8, 256>}, {transform_indices = @transform_2, window_bounds = array<i64: 8, 1>}]} {
    %c0_i32 = arith.constant 0 : i32
    %0 = arith.cmpi eq, %arg1, %c0_i32 : i32
    %1 = arith.extui %0 : i1 to i32
    %c0_i32_0 = arith.constant 0 : i32
    %2 = arith.cmpi ne, %1, %c0_i32_0 : i32
    scf.if %2 {
      %c0_29 = arith.constant 0 : index
      %c0_30 = arith.constant 0 : index
      %36 = vector.load %arg2[%c0_29, %c0_30] : memref<8x256xf32, #tpu.memory_space<vmem>>, vector<8x256xf32>
      %c0_31 = arith.constant 0 : index
      %c0_32 = arith.constant 0 : index
      %37 = vector.load %arg3[%c0_31, %c0_32] : memref<8x256xf32, #tpu.memory_space<vmem>>, vector<8x256xf32>
      %cst_33 = arith.constant dense<0.000000e+00> : vector<8xf32>
      %38 = vector.multi_reduction <add>, %36, %cst_33 [1] : vector<8x256xf32> to vector<8xf32>
      %39 = vector.shape_cast %38 : vector<8xf32> to vector<8x1xf32>
      %cst_34 = arith.constant 3.906250e-03 : f32
      %40 = vector.broadcast %cst_34 : f32 to vector<8x1xf32>
      %41 = arith.mulf %39, %40 : vector<8x1xf32>
      %c0_35 = arith.constant 0 : index
      %c0_36 = arith.constant 0 : index
      %42 = vector.load %arg5[%c0_35, %c0_36] : memref<8x1xf32, #tpu.memory_space<vmem>>, vector<8x1xf32>
      tpu.vector_store %arg5[%c0_35, %c0_36], %41 {strides = array<i32>} : memref<8x1xf32, #tpu.memory_space<vmem>>, vector<8x1xf32>,
      %cst_37 = arith.constant dense<0.000000e+00> : vector<8xf32>
      %43 = vector.multi_reduction <add>, %37, %cst_37 [1] : vector<8x256xf32> to vector<8xf32>
      %44 = vector.shape_cast %43 : vector<8xf32> to vector<8x1xf32>
      %cst_38 = arith.constant 3.906250e-03 : f32
      %45 = vector.broadcast %cst_38 : f32 to vector<8x1xf32>
      %46 = arith.mulf %44, %45 : vector<8x1xf32>
      %c0_39 = arith.constant 0 : index
      %c0_40 = arith.constant 0 : index
      %47 = vector.load %arg6[%c0_39, %c0_40] : memref<8x1xf32, #tpu.memory_space<vmem>>, vector<8x1xf32>
      tpu.vector_store %arg6[%c0_39, %c0_40], %46 {strides = array<i32>} : memref<8x1xf32, #tpu.memory_space<vmem>>, vector<8x1xf32>,
      %cst_41 = arith.constant 0.000000e+00 : f32
      %48 = vector.broadcast %cst_41 : f32 to vector<8x1xf32>
      %c0_42 = arith.constant 0 : index
      %c0_43 = arith.constant 0 : index
      %49 = vector.load %arg7[%c0_42, %c0_43] : memref<8x1xf32, #tpu.memory_space<vmem>>, vector<8x1xf32>
      tpu.vector_store %arg7[%c0_42, %c0_43], %48 {strides = array<i32>} : memref<8x1xf32, #tpu.memory_space<vmem>>, vector<8x1xf32>,
      %cst_44 = arith.constant 0.000000e+00 : f32
      %50 = vector.broadcast %cst_44 : f32 to vector<8x1xf32>
      %c0_45 = arith.constant 0 : index
      %c0_46 = arith.constant 0 : index
      %51 = vector.load %arg8[%c0_45, %c0_46] : memref<8x1xf32, #tpu.memory_space<vmem>>, vector<8x1xf32>
      tpu.vector_store %arg8[%c0_45, %c0_46], %50 {strides = array<i32>} : memref<8x1xf32, #tpu.memory_space<vmem>>, vector<8x1xf32>,
      %cst_47 = arith.constant 0.000000e+00 : f32
      %52 = vector.broadcast %cst_47 : f32 to vector<8x1xf32>
      %c0_48 = arith.constant 0 : index
      %c0_49 = arith.constant 0 : index
      %53 = vector.load %arg9[%c0_48, %c0_49] : memref<8x1xf32, #tpu.memory_space<vmem>>, vector<8x1xf32>
      tpu.vector_store %arg9[%c0_48, %c0_49], %52 {strides = array<i32>} : memref<8x1xf32, #tpu.memory_space<vmem>>, vector<8x1xf32>,
      %cst_50 = arith.constant 0.000000e+00 : f32
      %54 = vector.broadcast %cst_50 : f32 to vector<8x1xf32>
      %c0_51 = arith.constant 0 : index
      %c0_52 = arith.constant 0 : index
      %55 = vector.load %arg10[%c0_51, %c0_52] : memref<8x1xf32, #tpu.memory_space<vmem>>, vector<8x1xf32>
      tpu.vector_store %arg10[%c0_51, %c0_52], %54 {strides = array<i32>} : memref<8x1xf32, #tpu.memory_space<vmem>>, vector<8x1xf32>,
    } else {
    }
    %c0 = arith.constant 0 : index
    %c0_1 = arith.constant 0 : index
    %3 = vector.load %arg2[%c0, %c0_1] : memref<8x256xf32, #tpu.memory_space<vmem>>, vector<8x256xf32>
    %c0_2 = arith.constant 0 : index
    %c0_3 = arith.constant 0 : index
    %4 = vector.load %arg3[%c0_2, %c0_3] : memref<8x256xf32, #tpu.memory_space<vmem>>, vector<8x256xf32>
    %c0_4 = arith.constant 0 : index
    %c0_5 = arith.constant 0 : index
    %5 = vector.load %arg5[%c0_4, %c0_5] : memref<8x1xf32, #tpu.memory_space<vmem>>, vector<8x1xf32>
    %6 = vector.broadcast %5 : vector<8x1xf32> to vector<8x256xf32>
    %7 = arith.subf %3, %6 : vector<8x256xf32>
    %c0_6 = arith.constant 0 : index
    %c0_7 = arith.constant 0 : index
    %8 = vector.load %arg6[%c0_6, %c0_7] : memref<8x1xf32, #tpu.memory_space<vmem>>, vector<8x1xf32>
    %9 = vector.broadcast %8 : vector<8x1xf32> to vector<8x256xf32>
    %10 = arith.subf %4, %9 : vector<8x256xf32>
    %c0_8 = arith.constant 0 : index
    %c0_9 = arith.constant 0 : index
    %11 = vector.load %arg7[%c0_8, %c0_9] : memref<8x1xf32, #tpu.memory_space<vmem>>, vector<8x1xf32>
    %cst = arith.constant dense<0.000000e+00> : vector<8xf32>
    %12 = vector.multi_reduction <add>, %7, %cst [1] : vector<8x256xf32> to vector<8xf32>
    %13 = vector.shape_cast %12 : vector<8xf32> to vector<8x1xf32>
    %14 = arith.addf %11, %13 : vector<8x1xf32>
    %c0_10 = arith.constant 0 : index
    %c0_11 = arith.constant 0 : index
    %15 = vector.load %arg7[%c0_10, %c0_11] : memref<8x1xf32, #tpu.memory_space<vmem>>, vector<8x1xf32>
    tpu.vector_store %arg7[%c0_10, %c0_11], %14 {strides = array<i32>} : memref<8x1xf32, #tpu.memory_space<vmem>>, vector<8x1xf32>,
    %c0_12 = arith.constant 0 : index
    %c0_13 = arith.constant 0 : index
    %16 = vector.load %arg8[%c0_12, %c0_13] : memref<8x1xf32, #tpu.memory_space<vmem>>, vector<8x1xf32>
    %17 = arith.mulf %7, %7 : vector<8x256xf32>
    %cst_14 = arith.constant dense<0.000000e+00> : vector<8xf32>
    %18 = vector.multi_reduction <add>, %17, %cst_14 [1] : vector<8x256xf32> to vector<8xf32>
    %19 = vector.shape_cast %18 : vector<8xf32> to vector<8x1xf32>
    %20 = arith.addf %16, %19 : vector<8x1xf32>
    %c0_15 = arith.constant 0 : index
    %c0_16 = arith.constant 0 : index
    %21 = vector.load %arg8[%c0_15, %c0_16] : memref<8x1xf32, #tpu.memory_space<vmem>>, vector<8x1xf32>
    tpu.vector_store %arg8[%c0_15, %c0_16], %20 {strides = array<i32>} : memref<8x1xf32, #tpu.memory_space<vmem>>, vector<8x1xf32>,
    %c0_17 = arith.constant 0 : index
    %c0_18 = arith.constant 0 : index
    %22 = vector.load %arg9[%c0_17, %c0_18] : memref<8x1xf32, #tpu.memory_space<vmem>>, vector<8x1xf32>
    %cst_19 = arith.constant dense<0.000000e+00> : vector<8xf32>
    %23 = vector.multi_reduction <add>, %10, %cst_19 [1] : vector<8x256xf32> to vector<8xf32>
    %24 = vector.shape_cast %23 : vector<8xf32> to vector<8x1xf32>
    %25 = arith.addf %22, %24 : vector<8x1xf32>
    %c0_20 = arith.constant 0 : index
    %c0_21 = arith.constant 0 : index
    %26 = vector.load %arg9[%c0_20, %c0_21] : memref<8x1xf32, #tpu.memory_space<vmem>>, vector<8x1xf32>
    tpu.vector_store %arg9[%c0_20, %c0_21], %25 {strides = array<i32>} : memref<8x1xf32, #tpu.memory_space<vmem>>, vector<8x1xf32>,
    %c0_22 = arith.constant 0 : index
    %c0_23 = arith.constant 0 : index
    %27 = vector.load %arg10[%c0_22, %c0_23] : memref<8x1xf32, #tpu.memory_space<vmem>>, vector<8x1xf32>
    %28 = arith.mulf %10, %10 : vector<8x256xf32>
    %cst_24 = arith.constant dense<0.000000e+00> : vector<8xf32>
    %29 = vector.multi_reduction <add>, %28, %cst_24 [1] : vector<8x256xf32> to vector<8xf32>
    %30 = vector.shape_cast %29 : vector<8xf32> to vector<8x1xf32>
    %31 = arith.addf %27, %30 : vector<8x1xf32>
    %c0_25 = arith.constant 0 : index
    %c0_26 = arith.constant 0 : index
    %32 = vector.load %arg10[%c0_25, %c0_26] : memref<8x1xf32, #tpu.memory_space<vmem>>, vector<8x1xf32>
    tpu.vector_store %arg10[%c0_25, %c0_26], %31 {strides = array<i32>} : memref<8x1xf32, #tpu.memory_space<vmem>>, vector<8x1xf32>,
    %c0_i32_27 = arith.constant 0 : i32
    %33 = arith.cmpi eq, %arg1, %c0_i32_27 : i32
    %34 = arith.extui %33 : i1 to i32
    %c0_i32_28 = arith.constant 0 : i32
    %35 = arith.cmpi ne, %34, %c0_i32_28 : i32
    scf.if %35 {
      %c0_29 = arith.constant 0 : index
      %c0_30 = arith.constant 0 : index
      %36 = vector.load %arg7[%c0_29, %c0_30] : memref<8x1xf32, #tpu.memory_space<vmem>>, vector<8x1xf32>
      %c0_31 = arith.constant 0 : index
      %c0_32 = arith.constant 0 : index
      %37 = vector.load %arg8[%c0_31, %c0_32] : memref<8x1xf32, #tpu.memory_space<vmem>>, vector<8x1xf32>
      %38 = arith.mulf %36, %36 : vector<8x1xf32>
      %cst_33 = arith.constant 3.906250e-03 : f32
      %39 = vector.broadcast %cst_33 : f32 to vector<8x1xf32>
      %40 = arith.mulf %38, %39 : vector<8x1xf32>
      %41 = arith.subf %37, %40 : vector<8x1xf32>
      %cst_34 = arith.constant 0.00392156886 : f32
      %42 = vector.broadcast %cst_34 : f32 to vector<8x1xf32>
      %43 = arith.mulf %41, %42 : vector<8x1xf32>
      %cst_35 = arith.constant 0.000000e+00 : f32
      %44 = vector.broadcast %cst_35 : f32 to vector<8x1xf32>
      %45 = arith.maximumf %43, %44 : vector<8x1xf32>
      %46 = math.sqrt %45 : vector<8x1xf32>
      %c0_36 = arith.constant 0 : index
      %c0_37 = arith.constant 0 : index
      %47 = vector.load %arg9[%c0_36, %c0_37] : memref<8x1xf32, #tpu.memory_space<vmem>>, vector<8x1xf32>
      %c0_38 = arith.constant 0 : index
      %c0_39 = arith.constant 0 : index
      %48 = vector.load %arg10[%c0_38, %c0_39] : memref<8x1xf32, #tpu.memory_space<vmem>>, vector<8x1xf32>
      %49 = arith.mulf %47, %47 : vector<8x1xf32>
      %cst_40 = arith.constant 3.906250e-03 : f32
      %50 = vector.broadcast %cst_40 : f32 to vector<8x1xf32>
      %51 = arith.mulf %49, %50 : vector<8x1xf32>
      %52 = arith.subf %48, %51 : vector<8x1xf32>
      %cst_41 = arith.constant 0.00392156886 : f32
      %53 = vector.broadcast %cst_41 : f32 to vector<8x1xf32>
      %54 = arith.mulf %52, %53 : vector<8x1xf32>
      %cst_42 = arith.constant 0.000000e+00 : f32
      %55 = vector.broadcast %cst_42 : f32 to vector<8x1xf32>
      %56 = arith.maximumf %54, %55 : vector<8x1xf32>
      %57 = math.sqrt %56 : vector<8x1xf32>
      %58 = arith.subf %46, %57 : vector<8x1xf32>
      %59 = arith.mulf %58, %58 : vector<8x1xf32>
      %c0_43 = arith.constant 0 : index
      %c0_44 = arith.constant 0 : index
      %60 = vector.load %arg4[%c0_43, %c0_44] : memref<8x1xf32, #tpu.memory_space<vmem>>, vector<8x1xf32>
      tpu.vector_store %arg4[%c0_43, %c0_44], %59 {strides = array<i32>} : memref<8x1xf32, #tpu.memory_space<vmem>>, vector<8x1xf32>,
    } else {
    }
    return
  }
  func.func @transform_0(%arg0: i32, %arg1: i32) -> (i32, i32) {
    %c0_i32 = arith.constant 0 : i32
    return %arg0, %arg1 : i32, i32
  }
  func.func @transform_1(%arg0: i32, %arg1: i32) -> (i32, i32) {
    %c0_i32 = arith.constant 0 : i32
    return %arg0, %arg1 : i32, i32
  }
  func.func @transform_2(%arg0: i32, %arg1: i32) -> (i32, i32) {
    %c0_i32 = arith.constant 0 : i32
    %c0_i32_0 = arith.constant 0 : i32
    return %arg0, %c0_i32 : i32, i32
  }
}

</mosaic_0001>

<llo_original>
// kernel: tpu_custom_call.1
$region0: #{tpu_custom_call.1}
  #allocation0 [shape = 'u32[]', space=smem, size = 0x4, offset = 0x4, fixed_abs, tag = 'smem constant byte address 0x4 - core index']
  #allocation1 [shape = 'u32[72,128]{1,0:T(1,128)}', space=vmem, size = 0x9000, scoped, tag = 'internal scratch']
  #allocation2 [shape = 'f32[8,1]{1,0:T(8,128)}', space=vmem, size = 0x1000, scoped, tag = 'scratch operand']
  #allocation3 [shape = 'f32[8,1]{1,0:T(8,128)}', space=vmem, size = 0x1000, scoped, tag = 'scratch operand']
  #allocation4 [shape = 'f32[8,1]{1,0:T(8,128)}', space=vmem, size = 0x1000, scoped, tag = 'scratch operand']
  #allocation5 [shape = 'f32[8,1]{1,0:T(8,128)}', space=vmem, size = 0x1000, scoped, tag = 'scratch operand']
  #allocation6 [shape = 'f32[8,1]{1,0:T(8,128)}', space=vmem, size = 0x1000, scoped, tag = 'scratch operand']
  #allocation7 [shape = 'f32[8,1]{1,0:T(8,128)}', space=vmem, size = 0x1000, scoped, tag = 'scratch operand']
  %s0 = inlined_call_operand.hbm [shape: f32[8,256], index: 0, kind: input, shape index: {}]
  %s1 = inlined_call_operand.hbm [shape: f32[8,256], index: 1, kind: input, shape index: {}]
  %s2 = inlined_call_operand.vmem [shape: f32[8,1], index: 2, kind: output, shape index: {}]
  %s3 = sld [smem:[#allocation0]]
  $region34: #{tpu_custom_call.1} parent=0
    _
  %s5 = ssub.s32 1, %s3
  %s6 = scalar_select 0, %s5, %s3
  $region1: #{tpu_custom_call.1} parent=0
    #allocation8 [shape = 'u8[8192]{0}', space=vmem, size = 0x2000, scoped, tag = 'input window, operand 0, single buffered']
    #allocation9 [shape = 's32[1]{0}', space=sflag, size = 0x4, scoped, tag = 'scoped memory for tpu_custom_call.1']
    #allocation10 [shape = 'u8[8192]{0}', space=vmem, size = 0x2000, scoped, tag = 'input window, operand 1, single buffered']
    #allocation11 [shape = 's32[1]{0}', space=sflag, size = 0x4, scoped, tag = 'scoped memory for tpu_custom_call.1']
    %7 = vsyncpa [#allocation9], 0
    %8 = vsyncpa [#allocation11], 0
    // Predicated region
    $region2: #{tpu_custom_call.1} parent=1 // pred_check
      _
    $region3: #{tpu_custom_call.1} parent=1 // pred_check_branch
      %10 = sbr.rel (0) target = $region5
    $region4: #{tpu_custom_call.1} parent=1 // pred_region
      %12 = vsyncadd [#allocation9], 0
      %s14 = sshll.u32 %s0, 4
      %s15 = int_to_ptr.hbm [resolvable:$true] %s14
      %s16 = sshll.u32 [#allocation8], 4
      %s17 = int_to_ptr.vmem [resolvable:$true] %s16
      %19 = dma.hbm_to_vmem [thread:$0]  %s15, 256, %s17, [#allocation9]
    $region5: #{tpu_custom_call.1} parent=1 // pred_fallthru
      _
    // Predicated region
    $region6: #{tpu_custom_call.1} parent=1 // pred_check
      _
    $region7: #{tpu_custom_call.1} parent=1 // pred_check_branch
      %21 = sbr.rel (0) target = $region9
    $region8: #{tpu_custom_call.1} parent=1 // pred_region
      %23 = vsyncadd [#allocation11], 0
      %s25 = sshll.u32 %s1, 4
      %s26 = int_to_ptr.hbm [resolvable:$true] %s25
      %s27 = sshll.u32 [#allocation10], 4
      %s28 = int_to_ptr.vmem [resolvable:$true] %s27
      %30 = dma.hbm_to_vmem [thread:$0]  %s26, 256, %s28, [#allocation11]
    $region9: #{tpu_custom_call.1} parent=1 // pred_fallthru
      _
    // Predicated region
    $region10: #{tpu_custom_call.1} parent=1 // pred_check
      _
    $region11: #{tpu_custom_call.1} parent=1 // pred_check_branch
      %32 = sbr.rel (0) target = $region13
    $region12: #{tpu_custom_call.1} parent=1 // pred_region
      %34 = dma.done [#allocation9], 256
    $region13: #{tpu_custom_call.1} parent=1 // pred_fallthru
      _
    // Predicated region
    $region14: #{tpu_custom_call.1} parent=1 // pred_check
      _
    $region15: #{tpu_custom_call.1} parent=1 // pred_check_branch
      %36 = sbr.rel (0) target = $region17
    $region16: #{tpu_custom_call.1} parent=1 // pred_region
      %38 = dma.done [#allocation11], 256
    $region17: #{tpu_custom_call.1} parent=1 // pred_fallthru
      _
    %p39 = scmp.eq.s32.totalorder 0, 0
    // Predicated region
    $region18: #{tpu_custom_call.1} parent=1 // pred_check
      %p40 = pneg %p39
    $region19: #{tpu_custom_call.1} parent=1 // pred_check_branch
      %42 = sbr.rel (%p40) target = $region21
    $region20: #{tpu_custom_call.1} parent=1 // pred_region
      %v43 = vld [vmem:[#allocation8] sm:$0xff]
      %v44 = vld [vmem:[#allocation8 + $0x8] sm:$0xff]
      %v45 = vld [vmem:[#allocation10] sm:$0xff]
      %v46 = vld [vmem:[#allocation10 + $0x8] sm:$0xff]
      %v47 = vadd.f32 %v43, %v44
      %48 = vadd.xlane.f32.xlu0 %v47
      %v49 = vpop.xlane.xlu0 %48
      %v50 = vmul.f32 %v49, 0.00390625
      %vm51 = vcmask 7168
      %52 = vst.msk [vmem:[#allocation2] sm:$0xff] %vm51, %v50
      %v53 = vadd.f32 %v45, %v46
      %54 = vadd.xlane.f32.xlu0 %v53
      %v55 = vpop.xlane.xlu0 %54
      %v56 = vmul.f32 %v55, 0.00390625
      %57 = vst.msk [vmem:[#allocation3] sm:$0xff] %vm51, %v56
      %58 = vst.msk [vmem:[#allocation4] sm:$0xff] %vm51, 0.0
      %59 = vst.msk [vmem:[#allocation5] sm:$0xff] %vm51, 0.0
      %60 = vst.msk [vmem:[#allocation6] sm:$0xff] %vm51, 0.0
      %61 = vst.msk [vmem:[#allocation7] sm:$0xff] %vm51, 0.0
    $region21: #{tpu_custom_call.1} parent=1 // pred_fallthru
      _
    %v62 = vld [vmem:[#allocation8] sm:$0xff]
    %v63 = vld [vmem:[#allocation8 + $0x8] sm:$0xff]
    %v64 = vld [vmem:[#allocation10] sm:$0xff]
    %v65 = vld [vmem:[#allocation10 + $0x8] sm:$0xff]
    %v66 = vld [vmem:[#allocation2] sm:$0xff]
    %68 = vset.pattern.permute.xlu0 0
    %69 = vperm.xlu0 %68, %v66
    %v70 = vpop.permute.xlu0 %69
    %v72 = vsub.f32 %v62, %v70
    %v73 = vsub.f32 %v63, %v70
    %v74 = vld [vmem:[#allocation3] sm:$0xff]
    %76 = vset.pattern.permute.xlu0 0
    %77 = vperm.xlu0 %76, %v74
    %v78 = vpop.permute.xlu0 %77
    %v80 = vsub.f32 %v64, %v78
    %v81 = vsub.f32 %v65, %v78
    %v82 = vld [vmem:[#allocation4] sm:$0xff]
    %v83 = vadd.f32 %v72, %v73
    %84 = vadd.xlane.f32.xlu0 %v83
    %v85 = vpop.xlane.xlu0 %84
    %v86 = vadd.f32 %v82, %v85
    %vm87 = vcmask 7168
    %88 = vst.msk [vmem:[#allocation4] sm:$0xff] %vm87, %v86
    %v89 = vld [vmem:[#allocation5] sm:$0xff]
    %v90 = vmul.f32 %v72, %v72
    %v91 = vmul.f32 %v73, %v73
    %v92 = vadd.f32 %v90, %v91
    %93 = vadd.xlane.f32.xlu0 %v92
    %v94 = vpop.xlane.xlu0 %93
    %v95 = vadd.f32 %v89, %v94
    %96 = vst.msk [vmem:[#allocation5] sm:$0xff] %vm87, %v95
    %v97 = vld [vmem:[#allocation6] sm:$0xff]
    %v98 = vadd.f32 %v80, %v81
    %99 = vadd.xlane.f32.xlu0 %v98
    %v100 = vpop.xlane.xlu0 %99
    %v101 = vadd.f32 %v97, %v100
    %102 = vst.msk [vmem:[#allocation6] sm:$0xff] %vm87, %v101
    %v103 = vld [vmem:[#allocation7] sm:$0xff]
    %v104 = vmul.f32 %v80, %v80
    %v105 = vmul.f32 %v81, %v81
    %v106 = vadd.f32 %v104, %v105
    %107 = vadd.xlane.f32.xlu0 %v106
    %v108 = vpop.xlane.xlu0 %107
    %v109 = vadd.f32 %v103, %v108
    %110 = vst.msk [vmem:[#allocation7] sm:$0xff] %vm87, %v109
    // Predicated region
    $region22: #{tpu_custom_call.1} parent=1 // pred_check
      %p111 = pneg %p39
    $region23: #{tpu_custom_call.1} parent=1 // pred_check_branch
      %113 = sbr.rel (%p111) target = $region25
    $region24: #{tpu_custom_call.1} parent=1 // pred_region
      %v114 = vld [vmem:[#allocation4] sm:$0xff]
      %v115 = vld [vmem:[#allocation5] sm:$0xff]
      %v116 = vmul.f32 %v114, %v114
      %v117 = vmul.f32 %v116, 0.00390625
      %v118 = vsub.f32 %v115, %v117
      %v119 = vmul.f32 %v118, 0.003921569
      %v120 = vmax.f32 %v119, 0.0
      %v121 = vrsqrt.pop %v120
      %v122 = vmul.f32 %v121, %v120
      %v123 = vmul.f32 %v122, %v121
      %v124 = vmul.f32 0.5, %v123
      %v125 = vsub.f32 1.5, %v124
      %v126 = vmul.f32 %v121, %v125
      %v127 = vmul.f32 %v120, %v126
      %vm128 = vcmp.eq.f32.partialorder %v120, inf
      %v129 = vsel %vm128, %v120, %v127
      %vm130 = vcmp.eq.f32.partialorder %v120, 0.0
      %v131 = vand.u32 %v120, 2147483648
      %v132 = vsel %vm130, %v131, %v129
      %v133 = vld [vmem:[#allocation6] sm:$0xff]
      %v134 = vld [vmem:[#allocation7] sm:$0xff]
      %v135 = vmul.f32 %v133, %v133
      %v136 = vmul.f32 %v135, 0.00390625
      %v137 = vsub.f32 %v134, %v136
      %v138 = vmul.f32 %v137, 0.003921569
      %v139 = vmax.f32 %v138, 0.0
      %v140 = vrsqrt.pop %v139
      %v141 = vmul.f32 %v140, %v139
      %v142 = vmul.f32 %v141, %v140
      %v143 = vmul.f32 0.5, %v142
      %v144 = vsub.f32 1.5, %v143
      %v145 = vmul.f32 %v140, %v144
      %v146 = vmul.f32 %v139, %v145
      %vm147 = vcmp.eq.f32.partialorder %v139, inf
      %v148 = vsel %vm147, %v139, %v146
      %vm149 = vcmp.eq.f32.partialorder %v139, 0.0
      %v150 = vand.u32 %v139, 2147483648
      %v151 = vsel %vm149, %v150, %v148
      %v152 = vsub.f32 %v132, %v151
      %v153 = vmul.f32 %v152, %v152
      %154 = vst.msk [vmem:[%s2] sm:$0xff] %vm87, %v153
    $region25: #{tpu_custom_call.1} parent=1 // pred_fallthru
      _
    // Predicated region
    $region26: #{tpu_custom_call.1} parent=1 // pred_check
      _
    $region27: #{tpu_custom_call.1} parent=1 // pred_check_branch
      %156 = sbr.rel (0) target = $region29
    $region28: #{tpu_custom_call.1} parent=1 // pred_region
      _
    $region29: #{tpu_custom_call.1} parent=1 // pred_fallthru
      _
    // Predicated region
    $region30: #{tpu_custom_call.1} parent=1 // pred_check
      _
    $region31: #{tpu_custom_call.1} parent=1 // pred_check_branch
      %158 = sbr.rel (0) target = $region33
    $region32: #{tpu_custom_call.1} parent=1 // pred_region
      _
    $region33: #{tpu_custom_call.1} parent=1 // pred_fallthru
      _
    %159 = vsyncpa [#allocation9], 1
    %160 = vsyncpa [#allocation11], 1

</llo_original>
